<compile_context>
chip_gen: v7x
topology: tpu7x:2x2x1
jax: 0.10.0
libtpu: 0.0.40
codegen_flags: <defaults>
</compile_context>

<pallas_src>
import jax
import jax.numpy as jnp
from jax.experimental import pallas as pl
from jax.experimental.pallas import tpu as pltpu


def mlp_kernel(x_ref, w1_ref, b1_ref, w2_ref, b2_ref, w3_ref, b3_ref, o_ref):
    # x_ref: (TB, F) caller dtype ; w1: (F, 64) bf16 ; w2: (64, 32) bf16
    # b1: (1, 64) f32 ; b2: (1, 32) f32 ; w3: (1, 32) f32 ; b3: (1, 1) f32
    # o_ref: (TB//128, 128) f32 (lane-dense, native f32 tile)
    x = x_ref[...].astype(jnp.bfloat16)          # in-kernel cast rides the VPU (free slot)
    h1 = jnp.dot(x, w1_ref[...], preferred_element_type=jnp.float32)        # (TB, 64)
    h1 = jnp.maximum(h1 + b1_ref[...], 0.0)                                  # f32 ReLU
    h2 = jnp.dot(h1.astype(jnp.bfloat16), w2_ref[...],
                 preferred_element_type=jnp.float32)                         # (TB, 32)
    h2 = jnp.maximum(h2 + b2_ref[...], 0.0)
    # Final 32 -> 1 layer on VPU/XLU (elementwise mul + lane reduce), not the MXU.
    row = jnp.sum(h2 * w3_ref[...], axis=-1)                                 # (TB,)
    o_ref[...] = (row.reshape(o_ref.shape) + b3_ref[...]).astype(o_ref.dtype)


def chess_evaluator_forward(x, params, *, block_batch=8192):
    """x: (B, F) in f32 / bf16 / int8.  params: w1,b1,w2,b2,w3,b3 with w stored (in, out)."""
    B, F = x.shape

    # Normalize the requested tile so that whenever the grid has >1 tile the
    # output block's sublane dim (tb // 128) is a multiple of 8.
    block_batch = max(1024, (block_batch + 1023) // 1024 * 1024)

    # Batch tile: multiple of 128, shrunk for small batches; the last (partial)
    # tile is handled by Pallas' boundary-block padding (no wrapper jnp.pad).
    tb = min(block_batch, pl.cdiv(B, 128) * 128)
    n_tiles = pl.cdiv(B, tb)
    rows_out = n_tiles * tb            # output slab fully covers the grid

    # Tiny weight-side casts only (few KiB); x itself is passed through untouched.
    w1 = params["w1"].astype(jnp.bfloat16)
    w2 = params["w2"].astype(jnp.bfloat16)
    b1 = params["b1"].reshape(1, -1).astype(jnp.float32)
    b2 = params["b2"].reshape(1, -1).astype(jnp.float32)
    w3 = params["w3"].reshape(1, -1).astype(jnp.float32)   # (1, 32)
    b3 = params["b3"].reshape(1, 1).astype(jnp.float32)    # (1, 1)

    # Constant block index => operand stays resident in VMEM across grid steps.
    const = lambda shape: pl.BlockSpec(shape, lambda i: (0, 0))

    # VMEM budget: double-buffered x tile (worst-case lane padding F -> 128),
    # double-buffered output tile, plus slack; capped for v7x's 64 MiB/TC.
    lane_f = max(F, 128)
    need = 2 * tb * lane_f * x.dtype.itemsize + 2 * tb * 4 + (4 << 20)
    vmem_limit = int(min(max(need, 32 << 20), 48 << 20))

    out_tiles = pl.pallas_call(
        mlp_kernel,
        out_shape=jax.ShapeDtypeStruct((rows_out // 128, 128), jnp.float32),
        grid_spec=pltpu.PrefetchScalarGridSpec(
            num_scalar_prefetch=0,
            grid=(n_tiles,),
            in_specs=[
                pl.BlockSpec((tb, F), lambda i: (i, 0)),   # x: streamed over batch
                const(w1.shape), const(b1.shape),
                const(w2.shape), const(b2.shape),
                const(w3.shape), const(b3.shape),
            ],
            out_specs=pl.BlockSpec((tb // 128, 128), lambda i: (i, 0)),
        ),
        compiler_params=pltpu.CompilerParams(
            dimension_semantics=("parallel",),      # v7x: tiles split across 2 TCs
            vmem_limit_bytes=vmem_limit,
        ),
    )(x, w1, b1, w2, b2, w3, b3)

    # Lane-dense slab -> (B, 1), dropping rows that came from the partial last tile.
    return out_tiles.reshape(rows_out, 1)[:B]


def init_params(key, input_size):
    """Deterministic init mimicking PyTorch nn.Linear default (uniform +-1/sqrt(fan_in))."""
    def linear(key, fan_in, fan_out):
        kw, kb = jax.random.split(key)
        bound = 1.0 / jnp.sqrt(jnp.float32(fan_in))
        # stored transposed relative to torch: (in, out) so y = x @ W + b
        w = jax.random.uniform(kw, (fan_in, fan_out), jnp.float32, -bound, bound)
        b = jax.random.uniform(kb, (1, fan_out), jnp.float32, -bound, bound)
        return w, b

    k1, k2, k3 = jax.random.split(key, 3)
    w1, b1 = linear(k1, input_size, 64)
    w2, b2 = linear(k2, 64, 32)
    w3, b3 = linear(k3, 32, 1)
    return {"w1": w1, "b1": b1, "w2": w2, "b2": b2, "w3": w3, "b3": b3}


def reference_forward(x, p):
    """f32 reference mirroring the kernel's bf16-input / f32-accumulate math."""
    q = lambda a: a.astype(jnp.bfloat16).astype(jnp.float32)
    h1 = jnp.maximum(q(x.astype(jnp.float32)) @ q(p["w1"]) + p["b1"], 0.0)
    h2 = jnp.maximum(q(h1) @ q(p["w2"]) + p["b2"], 0.0)
    return h2 @ p["w3"] + p["b3"]


if __name__ == "__main__":
    key = jax.random.PRNGKey(0)
    k_x, k_p = jax.random.split(key)

    batch = 10          # deliberately not a multiple of 128 -> exercises the partial tile
    input_size = 64     # synthetic chess feature-vector width (CSV features are small ints)

    feats = jax.random.randint(k_x, (batch, input_size), -6, 7)   # int32 feature counts
    x_f32 = feats.astype(jnp.float32)                             # module-native dtype
    params = init_params(k_p, input_size)

    forward = jax.jit(chess_evaluator_forward)

    # Primary check: float32 inputs (matches the PyTorch module's forward).
    out = jax.block_until_ready(forward(x_f32, params))
    ref = reference_forward(x_f32, params)
    assert out.shape == (batch, 1), out.shape
    assert jnp.allclose(out, ref, atol=2e-3, rtol=2e-3), (
        "Pallas kernel mismatch vs reference; max abs err = "
        f"{jnp.max(jnp.abs(out - ref))}")

    # 1-byte streaming path: identical math (small-int features are exact in bf16),
    # ~4x less HBM traffic on the x stream.
    out_i8 = jax.block_until_ready(forward(feats.astype(jnp.int8), params))
    assert jnp.allclose(out_i8, out, atol=1e-5, rtol=1e-5), (
        "int8-streamed result differs from f32-streamed result; max abs err = "
        f"{jnp.max(jnp.abs(out_i8 - out))}")

    print("KERNEL_OK")
</pallas_src>

<mosaic_0001>
module attributes {stable_mosaic.version = 11 : i64} {
  func.func @mlp_kernel(%arg0: i32, %arg1: memref<128x64xf32, #tpu.memory_space<vmem>>, %arg2: memref<64x64xbf16, #tpu.memory_space<vmem>>, %arg3: memref<1x64xf32, #tpu.memory_space<vmem>>, %arg4: memref<64x32xbf16, #tpu.memory_space<vmem>>, %arg5: memref<1x32xf32, #tpu.memory_space<vmem>>, %arg6: memref<1x32xf32, #tpu.memory_space<vmem>>, %arg7: memref<1x1xf32, #tpu.memory_space<vmem>>, %arg8: memref<1x128xf32, #tpu.memory_space<vmem>>) attributes {dimension_semantics = [#tpu.dimension_semantics<parallel>], iteration_bounds = array<i64: 1>, scalar_prefetch = 0 : i64, scratch_operands = 0 : i64, tpu.core_type = #tpu.core_type<tc>, window_params = [{transform_indices = @transform_0, window_bounds = array<i64: 128, 64>}, {pipeline_mode = #tpu.pipeline_mode<synchronous>, transform_indices = @transform_1, window_bounds = array<i64: 64, 64>}, {pipeline_mode = #tpu.pipeline_mode<synchronous>, transform_indices = @transform_2, window_bounds = array<i64: 1, 64>}, {pipeline_mode = #tpu.pipeline_mode<synchronous>, transform_indices = @transform_3, window_bounds = array<i64: 64, 32>}, {pipeline_mode = #tpu.pipeline_mode<synchronous>, transform_indices = @transform_4, window_bounds = array<i64: 1, 32>}, {pipeline_mode = #tpu.pipeline_mode<synchronous>, transform_indices = @transform_5, window_bounds = array<i64: 1, 32>}, {pipeline_mode = #tpu.pipeline_mode<synchronous>, transform_indices = @transform_6, window_bounds = array<i64: 1, 1>}, {transform_indices = @transform_7, window_bounds = array<i64: 1, 128>}]} {
    %c0 = arith.constant 0 : index
    %c0_0 = arith.constant 0 : index
    %0 = vector.load %arg1[%c0, %c0_0] : memref<128x64xf32, #tpu.memory_space<vmem>>, vector<128x64xf32>
    %1 = arith.truncf %0 : vector<128x64xf32> to vector<128x64xbf16>
    %c0_1 = arith.constant 0 : index
    %c0_2 = arith.constant 0 : index
    %2 = vector.load %arg2[%c0_1, %c0_2] : memref<64x64xbf16, #tpu.memory_space<vmem>>, vector<64x64xbf16>
    %cst = arith.constant dense<0.000000e+00> : vector<128x64xf32>
    %3 = tpu.matmul %1, %2, %cst {dimension_numbers = #tpu.dot_dimension_numbers<[1], [0], [0], [1], [0, 0, 1, 1], [], []>} : vector<128x64xbf16>, vector<64x64xbf16>, vector<128x64xf32> -> vector<128x64xf32>
    %c0_3 = arith.constant 0 : index
    %c0_4 = arith.constant 0 : index
    %4 = vector.load %arg3[%c0_3, %c0_4] : memref<1x64xf32, #tpu.memory_space<vmem>>, vector<1x64xf32>
    %5 = vector.broadcast %4 : vector<1x64xf32> to vector<128x64xf32>
    %6 = arith.addf %3, %5 : vector<128x64xf32>
    %cst_5 = arith.constant 0.000000e+00 : f32
    %7 = vector.broadcast %cst_5 : f32 to vector<128x64xf32>
    %8 = arith.maximumf %6, %7 : vector<128x64xf32>
    %9 = arith.truncf %8 : vector<128x64xf32> to vector<128x64xbf16>
    %c0_6 = arith.constant 0 : index
    %c0_7 = arith.constant 0 : index
    %10 = vector.load %arg4[%c0_6, %c0_7] : memref<64x32xbf16, #tpu.memory_space<vmem>>, vector<64x32xbf16>
    %cst_8 = arith.constant dense<0.000000e+00> : vector<128x32xf32>
    %11 = tpu.matmul %9, %10, %cst_8 {dimension_numbers = #tpu.dot_dimension_numbers<[1], [0], [0], [1], [0, 0, 1, 1], [], []>} : vector<128x64xbf16>, vector<64x32xbf16>, vector<128x32xf32> -> vector<128x32xf32>
    %c0_9 = arith.constant 0 : index
    %c0_10 = arith.constant 0 : index
    %12 = vector.load %arg5[%c0_9, %c0_10] : memref<1x32xf32, #tpu.memory_space<vmem>>, vector<1x32xf32>
    %13 = vector.broadcast %12 : vector<1x32xf32> to vector<128x32xf32>
    %14 = arith.addf %11, %13 : vector<128x32xf32>
    %cst_11 = arith.constant 0.000000e+00 : f32
    %15 = vector.broadcast %cst_11 : f32 to vector<128x32xf32>
    %16 = arith.maximumf %14, %15 : vector<128x32xf32>
    %c0_12 = arith.constant 0 : index
    %c0_13 = arith.constant 0 : index
    %17 = vector.load %arg6[%c0_12, %c0_13] : memref<1x32xf32, #tpu.memory_space<vmem>>, vector<1x32xf32>
    %18 = vector.broadcast %17 : vector<1x32xf32> to vector<128x32xf32>
    %19 = arith.mulf %16, %18 : vector<128x32xf32>
    %cst_14 = arith.constant dense<0.000000e+00> : vector<128xf32>
    %20 = vector.multi_reduction <add>, %19, %cst_14 [1] : vector<128x32xf32> to vector<128xf32>
    %21 = vector.shape_cast %20 : vector<128xf32> to vector<1x128xf32>
    %c0_15 = arith.constant 0 : index
    %c0_16 = arith.constant 0 : index
    %22 = vector.load %arg7[%c0_15, %c0_16] : memref<1x1xf32, #tpu.memory_space<vmem>>, vector<1x1xf32>
    %23 = vector.broadcast %22 : vector<1x1xf32> to vector<1x128xf32>
    %24 = arith.addf %21, %23 : vector<1x128xf32>
    %c0_17 = arith.constant 0 : index
    %c0_18 = arith.constant 0 : index
    %25 = vector.load %arg8[%c0_17, %c0_18] : memref<1x128xf32, #tpu.memory_space<vmem>>, vector<1x128xf32>
    tpu.vector_store %arg8[%c0_17, %c0_18], %24 {strides = array<i32>} : memref<1x128xf32, #tpu.memory_space<vmem>>, vector<1x128xf32>,
    return
  }
  func.func @transform_0(%arg0: i32) -> (i32, i32) {
    %c0_i32 = arith.constant 0 : i32
    %c0_i32_0 = arith.constant 0 : i32
    return %arg0, %c0_i32 : i32, i32
  }
  func.func @transform_1(%arg0: i32) -> (i32, i32) {
    %c0_i32 = arith.constant 0 : i32
    %c0_i32_0 = arith.constant 0 : i32
    %c0_i32_1 = arith.constant 0 : i32
    return %c0_i32, %c0_i32_0 : i32, i32
  }
  func.func @transform_2(%arg0: i32) -> (i32, i32) {
    %c0_i32 = arith.constant 0 : i32
    %c0_i32_0 = arith.constant 0 : i32
    %c0_i32_1 = arith.constant 0 : i32
    return %c0_i32, %c0_i32_0 : i32, i32
  }
  func.func @transform_3(%arg0: i32) -> (i32, i32) {
    %c0_i32 = arith.constant 0 : i32
    %c0_i32_0 = arith.constant 0 : i32
    %c0_i32_1 = arith.constant 0 : i32
    return %c0_i32, %c0_i32_0 : i32, i32
  }
  func.func @transform_4(%arg0: i32) -> (i32, i32) {
    %c0_i32 = arith.constant 0 : i32
    %c0_i32_0 = arith.constant 0 : i32
    %c0_i32_1 = arith.constant 0 : i32
    return %c0_i32, %c0_i32_0 : i32, i32
  }
  func.func @transform_5(%arg0: i32) -> (i32, i32) {
    %c0_i32 = arith.constant 0 : i32
    %c0_i32_0 = arith.constant 0 : i32
    %c0_i32_1 = arith.constant 0 : i32
    return %c0_i32, %c0_i32_0 : i32, i32
  }
  func.func @transform_6(%arg0: i32) -> (i32, i32) {
    %c0_i32 = arith.constant 0 : i32
    %c0_i32_0 = arith.constant 0 : i32
    %c0_i32_1 = arith.constant 0 : i32
    return %c0_i32, %c0_i32_0 : i32, i32
  }
  func.func @transform_7(%arg0: i32) -> (i32, i32) {
    %c0_i32 = arith.constant 0 : i32
    %c0_i32_0 = arith.constant 0 : i32
    return %arg0, %c0_i32 : i32, i32
  }
}

</mosaic_0001>

<llo_original>
// kernel: chess_evaluator_forward.1
$region0: #{chess_evaluator_forward.1}
  #allocation0 [shape = 'u32[]', space=smem, size = 0x4, offset = 0x4, fixed_abs, tag = 'smem constant byte address 0x4 - core index']
  #allocation1 [shape = 'u32[144,128]{1,0:T(1,128)}', space=vmem, size = 0x12000, scoped, tag = 'internal scratch']
  #allocation2 [shape = 'f32[1,1]{1,0:T(1,128)S(1)}', space=vmem, size = 0x200, scoped, tag = 'scoped memory for chess_evaluator_forward.1']
  %s0 = inlined_call_operand.vmem [shape: f32[10,64], index: 0, kind: input, shape index: {}]
  %s1 = inlined_call_operand.vmem [shape: bf16[64,64], index: 1, kind: input, shape index: {}]
  %s2 = inlined_call_operand.vmem [shape: f32[1,64], index: 2, kind: input, shape index: {}]
  %s3 = inlined_call_operand.vmem [shape: bf16[64,32], index: 3, kind: input, shape index: {}]
  %s4 = inlined_call_operand.vmem [shape: f32[1,32], index: 4, kind: input, shape index: {}]
  %s5 = inlined_call_operand.vmem [shape: f32[1,32], index: 5, kind: input, shape index: {}]
  %s6 = inlined_call_operand.<no memory space> [shape: f32[1,1], index: 6, kind: input, shape index: {}]
  %s7 = inlined_call_operand.vmem [shape: f32[1,128], index: 7, kind: output, shape index: {}]
  %s8 = sld [smem:[#allocation0]]
  $region38: #{chess_evaluator_forward.1} parent=0
    _
  %s10 = ssub.s32 1, %s8
  %s11 = scalar_select 0, %s10, %s8
  %v12 = vstv %s6
  %13 = vst [vmem:[#allocation2] sm:$0x1] %v12
  // Predicated region
  $region2: #{chess_evaluator_forward.1} parent=0 // pred_check
    _
  $region3: #{chess_evaluator_forward.1} parent=0 // pred_check_branch
    %15 = sbr.rel (0) target = $region5
  $region4: #{chess_evaluator_forward.1} parent=0 // pred_region
    _
  $region5: #{chess_evaluator_forward.1} parent=0 // pred_fallthru
    _
  // Predicated region
  $region6: #{chess_evaluator_forward.1} parent=0 // pred_check
    _
  $region7: #{chess_evaluator_forward.1} parent=0 // pred_check_branch
    %17 = sbr.rel (0) target = $region9
  $region8: #{chess_evaluator_forward.1} parent=0 // pred_region
    _
  $region9: #{chess_evaluator_forward.1} parent=0 // pred_fallthru
    _
  // Predicated region
  $region10: #{chess_evaluator_forward.1} parent=0 // pred_check
    _
  $region11: #{chess_evaluator_forward.1} parent=0 // pred_check_branch
    %19 = sbr.rel (0) target = $region13
  $region12: #{chess_evaluator_forward.1} parent=0 // pred_region
    _
  $region13: #{chess_evaluator_forward.1} parent=0 // pred_fallthru
    _
  // Predicated region
  $region14: #{chess_evaluator_forward.1} parent=0 // pred_check
    _
  $region15: #{chess_evaluator_forward.1} parent=0 // pred_check_branch
    %21 = sbr.rel (0) target = $region17
  $region16: #{chess_evaluator_forward.1} parent=0 // pred_region
    _
  $region17: #{chess_evaluator_forward.1} parent=0 // pred_fallthru
    _
  // Predicated region
  $region18: #{chess_evaluator_forward.1} parent=0 // pred_check
    _
  $region19: #{chess_evaluator_forward.1} parent=0 // pred_check_branch
    %23 = sbr.rel (0) target = $region21
  $region20: #{chess_evaluator_forward.1} parent=0 // pred_region
    _
  $region21: #{chess_evaluator_forward.1} parent=0 // pred_fallthru
    _
  // Predicated region
  $region22: #{chess_evaluator_forward.1} parent=0 // pred_check
    _
  $region23: #{chess_evaluator_forward.1} parent=0 // pred_check_branch
    %25 = sbr.rel (0) target = $region25
  $region24: #{chess_evaluator_forward.1} parent=0 // pred_region
    _
  $region25: #{chess_evaluator_forward.1} parent=0 // pred_fallthru
    _
  // Predicated region
  $region26: #{chess_evaluator_forward.1} parent=0 // pred_check
    _
  $region27: #{chess_evaluator_forward.1} parent=0 // pred_check_branch
    %27 = sbr.rel (0) target = $region29
  $region28: #{chess_evaluator_forward.1} parent=0 // pred_region
    _
  $region29: #{chess_evaluator_forward.1} parent=0 // pred_fallthru
    _
  %v29 = vld [vmem:[%s0] sm:$0xff]
  %v30 = vld [vmem:[%s0 + $0x8] sm:$0xff]
  %v31 = vld [vmem:[%s0 + $0x10] sm:$0xff]
  %v32 = vld [vmem:[%s0 + $0x18] sm:$0xff]
  %v33 = vld [vmem:[%s0 + $0x20] sm:$0xff]
  %v34 = vld [vmem:[%s0 + $0x28] sm:$0xff]
  %v35 = vld [vmem:[%s0 + $0x30] sm:$0xff]
  %v36 = vld [vmem:[%s0 + $0x38] sm:$0xff]
  %v37 = vld [vmem:[%s0 + $0x40] sm:$0xff]
  %v38 = vld [vmem:[%s0 + $0x48] sm:$0xff]
  %v39 = vld [vmem:[%s0 + $0x50] sm:$0xff]
  %v40 = vld [vmem:[%s0 + $0x58] sm:$0xff]
  %v41 = vld [vmem:[%s0 + $0x60] sm:$0xff]
  %v42 = vld [vmem:[%s0 + $0x68] sm:$0xff]
  %v43 = vld [vmem:[%s0 + $0x70] sm:$0xff]
  %v44 = vld [vmem:[%s0 + $0x78] sm:$0xff]
  %v45 = vpack.c.bf16 %v30, %v29
  %v46 = vpack.c.bf16 %v32, %v31
  %v47 = vpack.c.bf16 %v34, %v33
  %v48 = vpack.c.bf16 %v36, %v35
  %v49 = vpack.c.bf16 %v38, %v37
  %v50 = vpack.c.bf16 %v40, %v39
  %v51 = vpack.c.bf16 %v42, %v41
  %v52 = vpack.c.bf16 %v44, %v43
  %v53 = vld [vmem:[%s1] sm:$0xf]
  %v54 = vld [vmem:[%s1 + $0x4] sm:$0xf]
  %v55 = vld [vmem:[%s1 + $0x8] sm:$0xf]
  %v56 = vld [vmem:[%s1 + $0xc] sm:$0xf]
  %v57 = vld [vmem:[%s1 + $0x10] sm:$0xf]
  %v58 = vld [vmem:[%s1 + $0x14] sm:$0xf]
  %v59 = vld [vmem:[%s1 + $0x18] sm:$0xf]
  %v60 = vld [vmem:[%s1 + $0x1c] sm:$0xf]
  %v61 = vld [vmem:[%s2] sm:$0x1]
  %v63 = vlaneseq
  %v64 = vshrl.u32 %v63, 7
  %v65 = vsub.s32 0, %v64
  %v66 = vrot.slane %v61, %v65
  %v76 = vunpack.c.l.b16 %v53
  %v77 = vunpack.c.l.b16 %v54
  %v78 = vunpack.c.l.b16 %v55
  %v79 = vunpack.c.l.b16 %v56
  %v80 = vunpack.c.l.b16 %v57
  %v81 = vunpack.c.l.b16 %v58
  %v82 = vunpack.c.l.b16 %v59
  %v83 = vunpack.c.l.b16 %v60
  %v84 = vpack.c.b16 %v77, %v76
  %v85 = vpack.c.b16 %v79, %v78
  %v86 = vpack.c.b16 %v81, %v80
  %v87 = vpack.c.b16 %v83, %v82
  %vm92 = vcmask 523264
  %v94 = vsel %vm92, %v45, 0
  %v97 = vsel %vm92, %v46, 0
  %v100 = vsel %vm92, %v47, 0
  %v103 = vsel %vm92, %v48, 0
  %v106 = vsel %vm92, %v49, 0
  %v109 = vsel %vm92, %v50, 0
  %v112 = vsel %vm92, %v51, 0
  %v115 = vsel %vm92, %v52, 0
  %117 = vmatprep.subr.bf16.mxu0 0
  %118 = vmatpush1.bf16.msra.mxu0 %v84
  %119 = vmatprep.subr.bf16.mxu0 0
  %120 = vmatpush1.bf16.msra.mxu0 %v85
  %121 = vmatprep.subr.bf16.mxu0 0
  %122 = vmatpush1.bf16.msra.mxu0 %v86
  %123 = vmatprep.subr.bf16.mxu0 0
  %124 = vmatpush1.bf16.msra.mxu0 %v87
  %125 = vmatprep.subr.bf16.mxu0 0
  %126 = vmatpush1.bf16.msra.mxu0 0
  %127 = vmatprep.subr.bf16.mxu0 0
  %128 = vmatpush1.bf16.msra.mxu0 0
  %129 = vmatprep.subr.bf16.mxu0 0
  %130 = vmatpush1.bf16.msra.mxu0 0
  %131 = vmatprep.subr.bf16.mxu0 0
  %132 = vmatpush1.bf16.msra.mxu0 0
  %133 = vmatprep.subr.bf16.mxu0 0
  %134 = vmatpush1.bf16.msra.mxu0 0
  %135 = vmatprep.subr.bf16.mxu0 0
  %136 = vmatpush1.bf16.msra.mxu0 0
  %137 = vmatprep.subr.bf16.mxu0 0
  %138 = vmatpush1.bf16.msra.mxu0 0
  %139 = vmatprep.subr.bf16.mxu0 0
  %140 = vmatpush1.bf16.msra.mxu0 0
  %141 = vmatprep.subr.bf16.mxu0 0
  %142 = vmatpush1.bf16.msra.mxu0 0
  %143 = vmatprep.subr.bf16.mxu0 0
  %144 = vmatpush1.bf16.msra.mxu0 0
  %145 = vmatprep.subr.bf16.mxu0 0
  %146 = vmatpush1.bf16.msra.mxu0 0
  %147 = vmatprep.subr.bf16.mxu0 0
  %148 = vmatpush1.bf16.msra.mxu0 0
  %149 = vmatprep.mubr.bf16.mxu0 0
  %150 = vmatmul.mubr.bf16.gmra.mrb[0].mxu0 %v94
  %v151 = vpop.f32.mrb[0].mxu0
  %v152 = vadd.f32 %v66, %v151
  %v153 = vpop.f32.mrb[0].mxu0
  %v154 = vpop.f32.mrb[0].mxu0
  %v155 = vadd.f32 %v66, %v154
  %v156 = vpop.f32.mrb[0].mxu0
  %157 = vmatprep.mubr.bf16.mxu0 0
  %158 = vmatmul.mubr.bf16.gmra.mrb[0].mxu0 %v97
  %v159 = vpop.f32.mrb[0].mxu0
  %v160 = vadd.f32 %v66, %v159
  %v161 = vpop.f32.mrb[0].mxu0
  %v162 = vpop.f32.mrb[0].mxu0
  %v163 = vadd.f32 %v66, %v162
  %v164 = vpop.f32.mrb[0].mxu0
  %165 = vmatprep.mubr.bf16.mxu0 0
  %166 = vmatmul.mubr.bf16.gmra.mrb[0].mxu0 %v100
  %v167 = vpop.f32.mrb[0].mxu0
  %v168 = vadd.f32 %v66, %v167
  %v169 = vpop.f32.mrb[0].mxu0
  %v170 = vpop.f32.mrb[0].mxu0
  %v171 = vadd.f32 %v66, %v170
  %v172 = vpop.f32.mrb[0].mxu0
  %173 = vmatprep.mubr.bf16.mxu0 0
  %174 = vmatmul.mubr.bf16.gmra.mrb[0].mxu0 %v103
  %v175 = vpop.f32.mrb[0].mxu0
  %v176 = vadd.f32 %v66, %v175
  %v177 = vpop.f32.mrb[0].mxu0
  %v178 = vpop.f32.mrb[0].mxu0
  %v179 = vadd.f32 %v66, %v178
  %v180 = vpop.f32.mrb[0].mxu0
  %181 = vmatprep.mubr.bf16.mxu0 0
  %182 = vmatmul.mubr.bf16.gmra.mrb[0].mxu0 %v106
  %v183 = vpop.f32.mrb[0].mxu0
  %v184 = vadd.f32 %v66, %v183
  %v185 = vpop.f32.mrb[0].mxu0
  %v186 = vpop.f32.mrb[0].mxu0
  %v187 = vadd.f32 %v66, %v186
  %v188 = vpop.f32.mrb[0].mxu0
  %189 = vmatprep.mubr.bf16.mxu0 0
  %190 = vmatmul.mubr.bf16.gmra.mrb[0].mxu0 %v109
  %v191 = vpop.f32.mrb[0].mxu0
  %v192 = vadd.f32 %v66, %v191
  %v193 = vpop.f32.mrb[0].mxu0
  %v194 = vpop.f32.mrb[0].mxu0
  %v195 = vadd.f32 %v66, %v194
  %v196 = vpop.f32.mrb[0].mxu0
  %197 = vmatprep.mubr.bf16.mxu0 0
  %198 = vmatmul.mubr.bf16.gmra.mrb[0].mxu0 %v112
  %v199 = vpop.f32.mrb[0].mxu0
  %v200 = vadd.f32 %v66, %v199
  %v201 = vpop.f32.mrb[0].mxu0
  %v202 = vpop.f32.mrb[0].mxu0
  %v203 = vadd.f32 %v66, %v202
  %v204 = vpop.f32.mrb[0].mxu0
  %205 = vmatprep.mubr.bf16.mxu0 0
  %206 = vmatmul.mubr.bf16.gmra.mrb[0].mxu0 %v115
  %v207 = vpop.f32.mrb[0].mxu0
  %v208 = vadd.f32 %v66, %v207
  %v209 = vpop.f32.mrb[0].mxu0
  %v210 = vpop.f32.mrb[0].mxu0
  %v211 = vadd.f32 %v66, %v210
  %v212 = vpop.f32.mrb[0].mxu0
  %213 = vdwg.mxu0
  %v214 = vmax.f32 %v152, 0.0
  %v215 = vmax.f32 %v155, 0.0
  %v216 = vmax.f32 %v160, 0.0
  %v217 = vmax.f32 %v163, 0.0
  %v218 = vmax.f32 %v168, 0.0
  %v219 = vmax.f32 %v171, 0.0
  %v220 = vmax.f32 %v176, 0.0
  %v221 = vmax.f32 %v179, 0.0
  %v222 = vmax.f32 %v184, 0.0
  %v223 = vmax.f32 %v187, 0.0
  %v224 = vmax.f32 %v192, 0.0
  %v225 = vmax.f32 %v195, 0.0
  %v226 = vmax.f32 %v200, 0.0
  %v227 = vmax.f32 %v203, 0.0
  %v228 = vmax.f32 %v208, 0.0
  %v229 = vmax.f32 %v211, 0.0
  %v230 = vpack.c.bf16 %v215, %v214
  %v231 = vpack.c.bf16 %v217, %v216
  %v232 = vpack.c.bf16 %v219, %v218
  %v233 = vpack.c.bf16 %v221, %v220
  %v234 = vpack.c.bf16 %v223, %v222
  %v235 = vpack.c.bf16 %v225, %v224
  %v236 = vpack.c.bf16 %v227, %v226
  %v237 = vpack.c.bf16 %v229, %v228
  %v238 = vld [vmem:[%s3] sm:$0xf]
  %v239 = vld [vmem:[%s3 + $0x4] sm:$0xf]
  %v240 = vld [vmem:[%s3 + $0x8] sm:$0xf]
  %v241 = vld [vmem:[%s3 + $0xc] sm:$0xf]
  %v242 = vld [vmem:[%s3 + $0x10] sm:$0xf]
  %v243 = vld [vmem:[%s3 + $0x14] sm:$0xf]
  %v244 = vld [vmem:[%s3 + $0x18] sm:$0xf]
  %v245 = vld [vmem:[%s3 + $0x1c] sm:$0xf]
  %v246 = vld [vmem:[%s4] sm:$0x1]
  %v248 = vlaneseq
  %v249 = vshrl.u32 %v248, 7
  %v250 = vsub.s32 0, %v249
  %v251 = vrot.slane %v246, %v250
  %v261 = vunpack.c.l.b16 %v238
  %v262 = vunpack.c.l.b16 %v239
  %v263 = vunpack.c.l.b16 %v240
  %v264 = vunpack.c.l.b16 %v241
  %v265 = vunpack.c.l.b16 %v242
  %v266 = vunpack.c.l.b16 %v243
  %v267 = vunpack.c.l.b16 %v244
  %v268 = vunpack.c.l.b16 %v245
  %v269 = vpack.c.b16 %v262, %v261
  %v270 = vpack.c.b16 %v264, %v263
  %v271 = vpack.c.b16 %v266, %v265
  %v272 = vpack.c.b16 %v268, %v267
  %v278 = vsel %vm92, %v230, 0
  %v281 = vsel %vm92, %v231, 0
  %v284 = vsel %vm92, %v232, 0
  %v287 = vsel %vm92, %v233, 0
  %v290 = vsel %vm92, %v234, 0
  %v293 = vsel %vm92, %v235, 0
  %v296 = vsel %vm92, %v236, 0
  %v299 = vsel %vm92, %v237, 0
  %301 = vmatprep.subr.bf16.mxu0 0
  %302 = vmatpush1.bf16.msra.mxu0 %v269
  %303 = vmatprep.subr.bf16.mxu0 0
  %304 = vmatpush1.bf16.msra.mxu0 %v270
  %305 = vmatprep.subr.bf16.mxu0 0
  %306 = vmatpush1.bf16.msra.mxu0 %v271
  %307 = vmatprep.subr.bf16.mxu0 0
  %308 = vmatpush1.bf16.msra.mxu0 %v272
  %309 = vmatprep.subr.bf16.mxu0 0
  %310 = vmatpush1.bf16.msra.mxu0 0
  %311 = vmatprep.subr.bf16.mxu0 0
  %312 = vmatpush1.bf16.msra.mxu0 0
  %313 = vmatprep.subr.bf16.mxu0 0
  %314 = vmatpush1.bf16.msra.mxu0 0
  %315 = vmatprep.subr.bf16.mxu0 0
  %316 = vmatpush1.bf16.msra.mxu0 0
  %317 = vmatprep.subr.bf16.mxu0 0
  %318 = vmatpush1.bf16.msra.mxu0 0
  %319 = vmatprep.subr.bf16.mxu0 0
  %320 = vmatpush1.bf16.msra.mxu0 0
  %321 = vmatprep.subr.bf16.mxu0 0
  %322 = vmatpush1.bf16.msra.mxu0 0
  %323 = vmatprep.subr.bf16.mxu0 0
  %324 = vmatpush1.bf16.msra.mxu0 0
  %325 = vmatprep.subr.bf16.mxu0 0
  %326 = vmatpush1.bf16.msra.mxu0 0
  %327 = vmatprep.subr.bf16.mxu0 0
  %328 = vmatpush1.bf16.msra.mxu0 0
  %329 = vmatprep.subr.bf16.mxu0 0
  %330 = vmatpush1.bf16.msra.mxu0 0
  %331 = vmatprep.subr.bf16.mxu0 0
  %332 = vmatpush1.bf16.msra.mxu0 0
  %333 = vmatprep.mubr.bf16.mxu0 0
  %334 = vmatmul.mubr.bf16.gmra.mrb[0].mxu0 %v278
  %v335 = vpop.f32.mrb[0].mxu0
  %v336 = vadd.f32 %v251, %v335
  %v337 = vpop.f32.mrb[0].mxu0
  %v338 = vpop.f32.mrb[0].mxu0
  %v339 = vadd.f32 %v251, %v338
  %v340 = vpop.f32.mrb[0].mxu0
  %341 = vmatprep.mubr.bf16.mxu0 0
  %342 = vmatmul.mubr.bf16.gmra.mrb[0].mxu0 %v281
  %v343 = vpop.f32.mrb[0].mxu0
  %v344 = vadd.f32 %v251, %v343
  %v345 = vpop.f32.mrb[0].mxu0
  %v346 = vpop.f32.mrb[0].mxu0
  %v347 = vadd.f32 %v251, %v346
  %v348 = vpop.f32.mrb[0].mxu0
  %349 = vmatprep.mubr.bf16.mxu0 0
  %350 = vmatmul.mubr.bf16.gmra.mrb[0].mxu0 %v284
  %v351 = vpop.f32.mrb[0].mxu0
  %v352 = vadd.f32 %v251, %v351
  %v353 = vpop.f32.mrb[0].mxu0
  %v354 = vpop.f32.mrb[0].mxu0
  %v355 = vadd.f32 %v251, %v354
  %v356 = vpop.f32.mrb[0].mxu0
  %357 = vmatprep.mubr.bf16.mxu0 0
  %358 = vmatmul.mubr.bf16.gmra.mrb[0].mxu0 %v287
  %v359 = vpop.f32.mrb[0].mxu0
  %v360 = vadd.f32 %v251, %v359
  %v361 = vpop.f32.mrb[0].mxu0
  %v362 = vpop.f32.mrb[0].mxu0
  %v363 = vadd.f32 %v251, %v362
  %v364 = vpop.f32.mrb[0].mxu0
  %365 = vmatprep.mubr.bf16.mxu0 0
  %366 = vmatmul.mubr.bf16.gmra.mrb[0].mxu0 %v290
  %v367 = vpop.f32.mrb[0].mxu0
  %v368 = vadd.f32 %v251, %v367
  %v369 = vpop.f32.mrb[0].mxu0
  %v370 = vpop.f32.mrb[0].mxu0
  %v371 = vadd.f32 %v251, %v370
  %v372 = vpop.f32.mrb[0].mxu0
  %373 = vmatprep.mubr.bf16.mxu0 0
  %374 = vmatmul.mubr.bf16.gmra.mrb[0].mxu0 %v293
  %v375 = vpop.f32.mrb[0].mxu0
  %v376 = vadd.f32 %v251, %v375
  %v377 = vpop.f32.mrb[0].mxu0
  %v378 = vpop.f32.mrb[0].mxu0
  %v379 = vadd.f32 %v251, %v378
  %v380 = vpop.f32.mrb[0].mxu0
  %381 = vmatprep.mubr.bf16.mxu0 0
  %382 = vmatmul.mubr.bf16.gmra.mrb[0].mxu0 %v296
  %v383 = vpop.f32.mrb[0].mxu0
  %v384 = vadd.f32 %v251, %v383
  %v385 = vpop.f32.mrb[0].mxu0
  %v386 = vpop.f32.mrb[0].mxu0
  %v387 = vadd.f32 %v251, %v386
  %v388 = vpop.f32.mrb[0].mxu0
  %389 = vmatprep.mubr.bf16.mxu0 0
  %390 = vmatmul.mubr.bf16.gmra.mrb[0].mxu0 %v299
  %v391 = vpop.f32.mrb[0].mxu0
  %v392 = vadd.f32 %v251, %v391
  %v393 = vpop.f32.mrb[0].mxu0
  %v394 = vpop.f32.mrb[0].mxu0
  %v395 = vadd.f32 %v251, %v394
  %v396 = vpop.f32.mrb[0].mxu0
  %397 = vdwg.mxu0
  %v398 = vmax.f32 %v336, 0.0
  %v399 = vmax.f32 %v339, 0.0
  %v400 = vmax.f32 %v344, 0.0
  %v401 = vmax.f32 %v347, 0.0
  %v402 = vmax.f32 %v352, 0.0
  %v403 = vmax.f32 %v355, 0.0
  %v404 = vmax.f32 %v360, 0.0
  %v405 = vmax.f32 %v363, 0.0
  %v406 = vmax.f32 %v368, 0.0
  %v407 = vmax.f32 %v371, 0.0
  %v408 = vmax.f32 %v376, 0.0
  %v409 = vmax.f32 %v379, 0.0
  %v410 = vmax.f32 %v384, 0.0
  %v411 = vmax.f32 %v387, 0.0
  %v412 = vmax.f32 %v392, 0.0
  %v413 = vmax.f32 %v395, 0.0
  %v414 = vld [vmem:[%s5] sm:$0x1]
  %v416 = vlaneseq
  %v417 = vshrl.u32 %v416, 7
  %v418 = vsub.s32 0, %v417
  %v419 = vrot.slane %v414, %v418
  %v421 = vmul.f32 %v398, %v419
  %v422 = vmul.f32 %v399, %v419
  %v423 = vmul.f32 %v400, %v419
  %v424 = vmul.f32 %v401, %v419
  %v425 = vmul.f32 %v402, %v419
  %v426 = vmul.f32 %v403, %v419
  %v427 = vmul.f32 %v404, %v419
  %v428 = vmul.f32 %v405, %v419
  %v429 = vmul.f32 %v406, %v419
  %v430 = vmul.f32 %v407, %v419
  %v431 = vmul.f32 %v408, %v419
  %v432 = vmul.f32 %v409, %v419
  %v433 = vmul.f32 %v410, %v419
  %v434 = vmul.f32 %v411, %v419
  %v435 = vmul.f32 %v412, %v419
  %v436 = vmul.f32 %v413, %v419
  %vm437 = vcmask 261120
  %v438 = vsel %vm437, %v421, 0.0
  %439 = vadd.xlane.f32.xlu0 %v438
  %v440 = vpop.xlane.xlu0 %439
  %v441 = vsel %vm437, %v422, 0.0
  %442 = vadd.xlane.f32.xlu0 %v441
  %v443 = vpop.xlane.xlu0 %442
  %v444 = vsel %vm437, %v423, 0.0
  %445 = vadd.xlane.f32.xlu0 %v444
  %v446 = vpop.xlane.xlu0 %445
  %v447 = vsel %vm437, %v424, 0.0
  %448 = vadd.xlane.f32.xlu0 %v447
  %v449 = vpop.xlane.xlu0 %448
  %v450 = vsel %vm437, %v425, 0.0
  %451 = vadd.xlane.f32.xlu0 %v450
  %v452 = vpop.xlane.xlu0 %451
  %v453 = vsel %vm437, %v426, 0.0
  %454 = vadd.xlane.f32.xlu0 %v453
  %v455 = vpop.xlane.xlu0 %454
  %v456 = vsel %vm437, %v427, 0.0
  %457 = vadd.xlane.f32.xlu0 %v456
  %v458 = vpop.xlane.xlu0 %457
  %v459 = vsel %vm437, %v428, 0.0
  %460 = vadd.xlane.f32.xlu0 %v459
  %v461 = vpop.xlane.xlu0 %460
  %v462 = vsel %vm437, %v429, 0.0
  %463 = vadd.xlane.f32.xlu0 %v462
  %v464 = vpop.xlane.xlu0 %463
  %v465 = vsel %vm437, %v430, 0.0
  %466 = vadd.xlane.f32.xlu0 %v465
  %v467 = vpop.xlane.xlu0 %466
  %v468 = vsel %vm437, %v431, 0.0
  %469 = vadd.xlane.f32.xlu0 %v468
  %v470 = vpop.xlane.xlu0 %469
  %v471 = vsel %vm437, %v432, 0.0
  %472 = vadd.xlane.f32.xlu0 %v471
  %v473 = vpop.xlane.xlu0 %472
  %v474 = vsel %vm437, %v433, 0.0
  %475 = vadd.xlane.f32.xlu0 %v474
  %v476 = vpop.xlane.xlu0 %475
  %v477 = vsel %vm437, %v434, 0.0
  %478 = vadd.xlane.f32.xlu0 %v477
  %v479 = vpop.xlane.xlu0 %478
  %v480 = vsel %vm437, %v435, 0.0
  %481 = vadd.xlane.f32.xlu0 %v480
  %v482 = vpop.xlane.xlu0 %481
  %v483 = vsel %vm437, %v436, 0.0
  %484 = vadd.xlane.f32.xlu0 %v483
  %v485 = vpop.xlane.xlu0 %484
  %v486 = vld [vmem:[#allocation2] sm:$0x1]
  %488 = vset.pattern.permute.xlu0 0
  %489 = vperm.xlu0 %488, %v486
  %v490 = vpop.permute.xlu0 %489
  %v492 = vlaneseq
  %v493 = vshrl.u32 %v492, 7
  %v494 = vsub.s32 0, %v493
  %v495 = vrot.slane %v490, %v494
  %v496 = vadd.f32 %v440, %v495
  %v497 = vadd.f32 %v443, %v495
  %v498 = vadd.f32 %v446, %v495
  %v499 = vadd.f32 %v449, %v495
  %v500 = vadd.f32 %v452, %v495
  %v501 = vadd.f32 %v455, %v495
  %v502 = vadd.f32 %v458, %v495
  %v503 = vadd.f32 %v461, %v495
  %v504 = vadd.f32 %v464, %v495
  %v505 = vadd.f32 %v467, %v495
  %v506 = vadd.f32 %v470, %v495
  %v507 = vadd.f32 %v473, %v495
  %v508 = vadd.f32 %v476, %v495
  %v509 = vadd.f32 %v479, %v495
  %v510 = vadd.f32 %v482, %v495
  %v511 = vadd.f32 %v485, %v495
  %v528 = vlaneseq
  %v529 = vand.u32 %v528, 127
  %v530 = vlaneseq
  %v531 = vshrl.u32 %v530, 7
  %v532 = vsub.s32 %v529, %v531
  %v533 = vrot.slane %v496, %v532
  %v534 = vadd.s32 %v529, 4294967288
  %v535 = vlaneseq
  %v536 = vshrl.u32 %v535, 7
  %v537 = vsub.s32 %v534, %v536
  %v538 = vrot.slane %v497, %v537
  %vm539 = vcmask 130112
  %v540 = vsel %vm539, %v538, %v533
  %v541 = vadd.s32 %v529, 4294967280
  %v542 = vlaneseq
  %v543 = vshrl.u32 %v542, 7
  %v544 = vsub.s32 %v541, %v543
  %v545 = vrot.slane %v498, %v544
  %vm546 = vcmask 195712
  %v547 = vsel %vm546, %v545, %v540
  %v548 = vadd.s32 %v529, 4294967272
  %v549 = vlaneseq
  %v550 = vshrl.u32 %v549, 7
  %v551 = vsub.s32 %v548, %v550
  %v552 = vrot.slane %v499, %v551
  %vm553 = vcmask 261312
  %v554 = vsel %vm553, %v552, %v547
  %v555 = vadd.s32 %v529, 4294967264
  %v556 = vlaneseq
  %v557 = vshrl.u32 %v556, 7
  %v558 = vsub.s32 %v555, %v557
  %v559 = vrot.slane %v500, %v558
  %vm560 = vcmask 326912
  %v561 = vsel %vm560, %v559, %v554
  %v562 = vadd.s32 %v529, 4294967256
  %v563 = vlaneseq
  %v564 = vshrl.u32 %v563, 7
  %v565 = vsub.s32 %v562, %v564
  %v566 = vrot.slane %v501, %v565
  %vm567 = vcmask 392512
  %v568 = vsel %vm567, %v566, %v561
  %v569 = vadd.s32 %v529, 4294967248
  %v570 = vlaneseq
  %v571 = vshrl.u32 %v570, 7
  %v572 = vsub.s32 %v569, %v571
  %v573 = vrot.slane %v502, %v572
  %vm574 = vcmask 458112
  %v575 = vsel %vm574, %v573, %v568
  %v576 = vadd.s32 %v529, 4294967240
  %v577 = vlaneseq
  %v578 = vshrl.u32 %v577, 7
  %v579 = vsub.s32 %v576, %v578
  %v580 = vrot.slane %v503, %v579
  %vm581 = vcmask 523712
  %v582 = vsel %vm581, %v580, %v575
  %v583 = vadd.s32 %v529, 4294967232
  %v584 = vlaneseq
  %v585 = vshrl.u32 %v584, 7
  %v586 = vsub.s32 %v583, %v585
  %v587 = vrot.slane %v504, %v586
  %vm588 = vcmask 589312
  %v589 = vsel %vm588, %v587, %v582
  %v590 = vadd.s32 %v529, 4294967224
  %v591 = vlaneseq
  %v592 = vshrl.u32 %v591, 7
  %v593 = vsub.s32 %v590, %v592
  %v594 = vrot.slane %v505, %v593
  %vm595 = vcmask 654912
  %v596 = vsel %vm595, %v594, %v589
  %v597 = vadd.s32 %v529, 4294967216
  %v598 = vlaneseq
  %v599 = vshrl.u32 %v598, 7
  %v600 = vsub.s32 %v597, %v599
  %v601 = vrot.slane %v506, %v600
  %vm602 = vcmask 720512
  %v603 = vsel %vm602, %v601, %v596
  %v604 = vadd.s32 %v529, 4294967208
  %v605 = vlaneseq
  %v606 = vshrl.u32 %v605, 7
  %v607 = vsub.s32 %v604, %v606
  %v608 = vrot.slane %v507, %v607
  %vm609 = vcmask 786112
  %v610 = vsel %vm609, %v608, %v603
  %v611 = vadd.s32 %v529, 4294967200
  %v612 = vlaneseq
  %v613 = vshrl.u32 %v612, 7
  %v614 = vsub.s32 %v611, %v613
  %v615 = vrot.slane %v508, %v614
  %vm616 = vcmask 851712
  %v617 = vsel %vm616, %v615, %v610
  %v618 = vadd.s32 %v529, 4294967192
  %v619 = vlaneseq
  %v620 = vshrl.u32 %v619, 7
  %v621 = vsub.s32 %v618, %v620
  %v622 = vrot.slane %v509, %v621
  %vm623 = vcmask 917312
  %v624 = vsel %vm623, %v622, %v617
  %v625 = vadd.s32 %v529, 4294967184
  %v626 = vlaneseq
  %v627 = vshrl.u32 %v626, 7
  %v628 = vsub.s32 %v625, %v627
  %v629 = vrot.slane %v510, %v628
  %vm630 = vcmask 982912
  %v631 = vsel %vm630, %v629, %v624
  %v632 = vadd.s32 %v529, 4294967176
  %v633 = vlaneseq
  %v634 = vshrl.u32 %v633, 7
  %v635 = vsub.s32 %v632, %v634
  %v636 = vrot.slane %v511, %v635
  %vm637 = vcmask 1048512
  %v638 = vsel %vm637, %v636, %v631
  %640 = vst [vmem:[%s7] sm:$0x1] %v638
  // Predicated region
  $region30: #{chess_evaluator_forward.1} parent=0 // pred_check
    _
  $region31: #{chess_evaluator_forward.1} parent=0 // pred_check_branch
    %642 = sbr.rel (0) target = $region33
  $region32: #{chess_evaluator_forward.1} parent=0 // pred_region
    _
  $region33: #{chess_evaluator_forward.1} parent=0 // pred_fallthru
    _
  // Predicated region
  $region34: #{chess_evaluator_forward.1} parent=0 // pred_check
    _
  $region35: #{chess_evaluator_forward.1} parent=0 // pred_check_branch
    %644 = sbr.rel (0) target = $region37
  $region36: #{chess_evaluator_forward.1} parent=0 // pred_region
    _
  $region37: #{chess_evaluator_forward.1} parent=0 // pred_fallthru
    _

</llo_original>
